<compile_context>
chip_gen: v5e
topology: v5e:2x2
jax: 0.10.0
libtpu: 0.0.40
codegen_flags: <defaults>
</compile_context>

<pallas_src>
import functools
from collections import defaultdict

import numpy as np
import jax
import jax.numpy as jnp
from jax.experimental import pallas as pl
from jax.experimental.pallas import tpu as pltpu


def _round_up(x, m):
    return (x + m - 1) // m * m


# ----------------------------------------------------------------------------
# Fused kernel: MLP + learnable rounding, per-variable lane-dense outputs
# ----------------------------------------------------------------------------
def _fused_round_kernel(f_ref, x_ref, im_ref, bm_ref, w1_ref, b1_ref, w2_ref,
                        b2_ref, *out_refs, splits, tolerance,
                        continuous_update):
    # --- MLP:  h = ReLU(f @ W1 + b1) @ W2_sel + b2_sel  (h stays on-chip)
    f = f_ref[...]
    z = jnp.dot(f, w1_ref[...], preferred_element_type=jnp.float32)
    z = jnp.maximum(z + b1_ref[...], 0.0)
    h = jnp.dot(z, w2_ref[...], preferred_element_type=jnp.float32) + b2_ref[...]

    # --- rounding (h is already column-aligned with the concatenated x)
    x = x_ref[...]
    x_flr = jnp.floor(x)
    x_cl = jnp.ceil(x)

    # diffBinarize forward: (h >= 0).float(); then the _int_mask tolerance
    # overrides (floor-check first, ceil-check second -> ceil wins ties).
    bnr = (h >= 0.0).astype(jnp.float32)
    bnr_int = jnp.where((x - x_flr) < tolerance, 0.0, bnr)
    bnr_int = jnp.where((x_cl - x) < tolerance, 1.0, bnr_int)
    int_val = x_flr + bnr_int                 # diffFloor(x) + masked binarize(h)
    bin_val = bnr                             # diffBinarize(h)

    # TODO(synk): torch's continuous_update path does `x + h` with the *full*
    # remaining h slice, which only broadcasts when shapes coincide; here we
    # use the column-aligned h, matching the matching-shape interpretation.
    base = x + h if continuous_update else x

    is_int = im_ref[...] != 0.0               # (1, D_x) resident mask rows
    is_bin = bm_ref[...] != 0.0
    out = jnp.where(is_int, int_val, base)
    out = jnp.where(is_bin, bin_val, out)     # bin assignment happens last

    for ref, (off, d) in zip(out_refs, splits):
        ref[...] = out[:, off:off + d].astype(ref.dtype)


def fused_round_forward(f, x_cat, int_mask, bin_mask, w1, b1, w2s, b2s, *,
                        splits, tolerance, continuous_update, tile_b):
    """f: (B, D_in) unpadded; x_cat: (B, D_x) unpadded; w1: (D_in, H_pad);
    b1: (1, H_pad); w2s: (H_pad, D_x); b2s/masks: (1, D_x)."""
    B, d_in = f.shape
    _, d_x = x_cat.shape
    h_dim = w1.shape[1]
    grid_b = pl.cdiv(B, tile_b)

    kern = functools.partial(
        _fused_round_kernel, splits=splits, tolerance=tolerance,
        continuous_update=continuous_update)

    out_shape = tuple(jax.ShapeDtypeStruct((B, d), jnp.float32)
                      for _, d in splits)
    out_specs = tuple(pl.BlockSpec((tile_b, d), lambda i: (i, 0))
                      for _, d in splits)

    flops = 2 * B * (d_in * h_dim + h_dim * d_x)
    bytes_accessed = 4 * (B * d_in + B * d_x           # streamed inputs
                          + d_in * h_dim + h_dim * d_x + h_dim + 3 * d_x  # resident
                          + B * d_x)                   # outputs

    return pl.pallas_call(
        kern,
        out_shape=out_shape,
        grid_spec=pltpu.PrefetchScalarGridSpec(
            num_scalar_prefetch=0,
            grid=(grid_b,),
            in_specs=[
                pl.BlockSpec((tile_b, d_in), lambda i: (i, 0)),   # f (unpadded)
                pl.BlockSpec((tile_b, d_x), lambda i: (i, 0)),    # x_cat (unpadded)
                pl.BlockSpec((1, d_x), lambda i: (0, 0)),         # int mask (resident)
                pl.BlockSpec((1, d_x), lambda i: (0, 0)),         # bin mask (resident)
                pl.BlockSpec((d_in, h_dim), lambda i: (0, 0)),    # W1 (resident)
                pl.BlockSpec((1, h_dim), lambda i: (0, 0)),       # b1 (resident)
                pl.BlockSpec((h_dim, d_x), lambda i: (0, 0)),     # W2 selected (resident)
                pl.BlockSpec((1, d_x), lambda i: (0, 0)),         # b2 selected (resident)
            ],
            out_specs=out_specs,
        ),
        compiler_params=pltpu.CompilerParams(
            dimension_semantics=("parallel",)),
        cost_estimate=pl.CostEstimate(
            flops=flops, transcendentals=0, bytes_accessed=bytes_accessed),
    )(f, x_cat, int_mask, bin_mask, w1, b1, w2s, b2s)


# ----------------------------------------------------------------------------
# roundModel forward wrapper (layout plumbing in plain JAX, compute in Pallas)
# ----------------------------------------------------------------------------
class RoundModelPallas:
    def __init__(self, mlp_params, param_keys, var_keys, output_keys=None,
                 int_ind=None, bin_ind=None, continuous_update=False,
                 tolerance=1e-3, name="Rounding", tile_b=1024):
        w1, b1, w2, b2 = mlp_params
        self.param_keys = list(param_keys)
        self.var_keys = list(var_keys)
        self.output_keys = list(output_keys) if output_keys else self.var_keys
        self.int_ind = int_ind if int_ind is not None else defaultdict(list)
        self.bin_ind = bin_ind if bin_ind is not None else defaultdict(list)
        self.continuous_update = continuous_update
        self.tolerance = float(tolerance)
        self.name = name
        self.tile_b = int(tile_b)

        self.D_in, self.H = int(w1.shape[0]), int(w1.shape[1])
        self.D_out = int(w2.shape[1])
        self.H_pad = _round_up(self.H, 128)   # lane-dense hidden; zero pad is exact

        # Zero-pad only the hidden (lane) axis once; inputs stay unpadded.
        self.w1_p = jnp.zeros((self.D_in, self.H_pad), jnp.float32
                              ).at[:, :self.H].set(jnp.asarray(w1, jnp.float32))
        self.b1_p = jnp.zeros((1, self.H_pad), jnp.float32
                              ).at[0, :self.H].set(jnp.asarray(b1, jnp.float32))
        self.w2 = jnp.asarray(w2, jnp.float32)
        self.b2 = jnp.asarray(b2, jnp.float32)
        self._cache = {}   # keyed on the per-variable width tuple

    # Per-shape constants: column-selected W2/b2 (aligned with the concatenated
    # x) and the precomputed int/bin lane-mask rows.
    def _build(self, dims):
        if dims in self._cache:
            return self._cache[dims]
        need = sum(dims) + len(dims) - 1          # torch advances h by d_k + 1
        if need > self.D_out:
            raise ValueError(
                f"layers output width {self.D_out} too small for variable "
                f"widths {dims} (needs >= {need})")

        sel_cols, splits, int_rows, bin_rows = [], [], [], []
        x_off, h_off = 0, 0
        for k, d in zip(self.var_keys, dims):
            sel_cols.extend(range(h_off, h_off + d))
            im = np.zeros((d,), np.float32)
            bm = np.zeros((d,), np.float32)
            ii = np.asarray(list(self.int_ind.get(k, [])), np.int32)
            bi = np.asarray(list(self.bin_ind.get(k, [])), np.int32)
            if ii.size:
                im[ii] = 1.0
            if bi.size:
                bm[bi] = 1.0
            int_rows.append(im)
            bin_rows.append(bm)
            splits.append((x_off, d))
            x_off += d
            h_off += d + 1

        D_x = x_off
        sel = np.asarray(sel_cols, np.int32)
        w2s = jnp.zeros((self.H_pad, D_x), jnp.float32
                        ).at[:self.H, :].set(self.w2[:, sel])
        b2s = self.b2[sel].reshape(1, D_x)
        im_row = jnp.asarray(np.concatenate(int_rows)).reshape(1, D_x)
        bm_row = jnp.asarray(np.concatenate(bin_rows)).reshape(1, D_x)

        entry = (w2s, b2s, im_row, bm_row, D_x, tuple(splits))
        self._cache[dims] = entry
        return entry

    def __call__(self, data):
        p = [data[k] for k in self.param_keys]
        xs = [data[k] for k in self.var_keys]
        dims = tuple(int(x.shape[1]) for x in xs)
        w2s, b2s, im_row, bm_row, D_x, splits = self._build(dims)

        f = jnp.concatenate(p + xs, axis=-1).astype(jnp.float32)   # (B, D_in)
        x_cat = jnp.concatenate(xs, axis=-1).astype(jnp.float32)   # (B, D_x)
        B = f.shape[0]

        # Batch tile: as large as possible (amortize ~0.35us/step overhead),
        # multiple of 8, but keep >= 2 grid steps when the batch allows it so
        # the "parallel" axis shards across both v7x TensorCores.  The ragged
        # last block (B not a multiple of tile_b) is handled by Pallas; padded
        # rows are never reduced across, so garbage rows are harmless.
        half = _round_up(max(-(-B // 2), 1), 8)
        tile_b = max(8, min(self.tile_b, half))

        outs = fused_round_forward(
            f, x_cat, im_row, bm_row, self.w1_p, self.b1_p, w2s, b2s,
            splits=splits, tolerance=self.tolerance,
            continuous_update=self.continuous_update, tile_b=tile_b)

        return {k_out: o for k_out, o in zip(self.output_keys, outs)}


# ----------------------------------------------------------------------------
# Pure-JAX reference (mirrors the PyTorch forward) for a sanity check
# ----------------------------------------------------------------------------
def reference_forward(model, data, mlp_params):
    w1, b1, w2, b2 = mlp_params
    f = jnp.concatenate([data[k] for k in model.param_keys] +
                        [data[k] for k in model.var_keys], axis=-1)
    h = jnp.maximum(f @ w1 + b1, 0.0) @ w2 + b2
    out = {}
    offset = 0
    for k_in, k_out in zip(model.var_keys, model.output_keys):
        d = data[k_in].shape[1]
        hk = h[:, offset:offset + d]
        x = data[k_in]
        ii = np.asarray(model.int_ind[k_in], np.int32)
        bi = np.asarray(model.bin_ind[k_in], np.int32)
        x_rnd = x
        if ii.size:
            xi = x[:, ii]
            bnr = (hk[:, ii] >= 0.0).astype(jnp.float32)
            bnr = jnp.where((xi - jnp.floor(xi)) < model.tolerance, 0.0, bnr)
            bnr = jnp.where((jnp.ceil(xi) - xi) < model.tolerance, 1.0, bnr)
            x_rnd = x_rnd.at[:, ii].set(jnp.floor(xi) + bnr)
        if bi.size:
            x_rnd = x_rnd.at[:, bi].set((hk[:, bi] >= 0.0).astype(jnp.float32))
        out[k_out] = x_rnd
        offset += d + 1
    return out


# ----------------------------------------------------------------------------
if __name__ == "__main__":
    key = jax.random.PRNGKey(0)
    kp, kx1, kx2, kw1, kb1, kw2, kb2, kbig = jax.random.split(key, 8)

    param_keys = ["p"]
    var_keys = ["x1", "x2"]
    dims = {"p": 4, "x1": 6, "x2": 5}
    int_ind = defaultdict(list, {"x1": [0, 1, 2], "x2": [0, 2]})
    bin_ind = defaultdict(list, {"x1": [3, 4], "x2": [1, 3]})

    # `layers`: Linear(D_in, H) -> ReLU -> Linear(H, D_out), deterministic init
    D_in = sum(dims.values())                        # 15
    H = 32
    D_out = sum(dims[k] + 1 for k in var_keys)       # 13 (matches h-slicing)
    w1 = 0.2 * jax.random.normal(kw1, (D_in, H), jnp.float32)
    b1 = 0.1 * jax.random.normal(kb1, (H,), jnp.float32)
    w2 = 0.2 * jax.random.normal(kw2, (H, D_out), jnp.float32)
    b2 = 0.1 * jax.random.normal(kb2, (D_out,), jnp.float32)
    mlp_params = (w1, b1, w2, b2)

    model = RoundModelPallas(mlp_params, param_keys, var_keys,
                             int_ind=int_ind, bin_ind=bin_ind,
                             continuous_update=False, tolerance=1e-3)

    # --- small batch (single grid step) ---------------------------------
    B = 8
    data = {
        "p": jax.random.normal(kp, (B, dims["p"]), jnp.float32),
        "x1": 3.0 * jax.random.normal(kx1, (B, dims["x1"]), jnp.float32),
        "x2": 3.0 * jax.random.normal(kx2, (B, dims["x2"]), jnp.float32),
    }
    out = model(data)
    out = jax.tree_util.tree_map(jax.block_until_ready, out)
    ref = reference_forward(model, data, mlp_params)
    for k in var_keys:
        np.testing.assert_allclose(np.asarray(out[k]), np.asarray(ref[k]),
                                   rtol=1e-5, atol=1e-5)

    # --- larger batch (2 grid steps + ragged last block) ----------------
    B2 = 200
    kb1_, kb2_, kb3_ = jax.random.split(kbig, 3)
    data2 = {
        "p": jax.random.normal(kb1_, (B2, dims["p"]), jnp.float32),
        "x1": 3.0 * jax.random.normal(kb2_, (B2, dims["x1"]), jnp.float32),
        "x2": 3.0 * jax.random.normal(kb3_, (B2, dims["x2"]), jnp.float32),
    }
    out2 = model(data2)
    out2 = jax.tree_util.tree_map(jax.block_until_ready, out2)
    ref2 = reference_forward(model, data2, mlp_params)
    for k in var_keys:
        np.testing.assert_allclose(np.asarray(out2[k]), np.asarray(ref2[k]),
                                   rtol=1e-5, atol=1e-5)

    print("KERNEL_OK")
</pallas_src>

<mosaic_0001>
module attributes {stable_mosaic.version = 11 : i64} {
  func.func @_fused_round_kernel(%arg0: i32, %arg1: memref<8x15xf32, #tpu.memory_space<vmem>>, %arg2: memref<8x11xf32, #tpu.memory_space<vmem>>, %arg3: memref<1x11xf32, #tpu.memory_space<vmem>>, %arg4: memref<1x11xf32, #tpu.memory_space<vmem>>, %arg5: memref<15x128xf32, #tpu.memory_space<vmem>>, %arg6: memref<1x128xf32, #tpu.memory_space<vmem>>, %arg7: memref<128x11xf32, #tpu.memory_space<vmem>>, %arg8: memref<1x11xf32, #tpu.memory_space<vmem>>, %arg9: memref<8x6xf32, #tpu.memory_space<vmem>>, %arg10: memref<8x5xf32, #tpu.memory_space<vmem>>) attributes {dimension_semantics = [#tpu.dimension_semantics<parallel>], iteration_bounds = array<i64: 1>, scalar_prefetch = 0 : i64, scratch_operands = 0 : i64, tpu.core_type = #tpu.core_type<tc>, window_params = [{transform_indices = @transform_0, window_bounds = array<i64: 8, 15>}, {transform_indices = @transform_1, window_bounds = array<i64: 8, 11>}, {pipeline_mode = #tpu.pipeline_mode<synchronous>, transform_indices = @transform_2, window_bounds = array<i64: 1, 11>}, {pipeline_mode = #tpu.pipeline_mode<synchronous>, transform_indices = @transform_3, window_bounds = array<i64: 1, 11>}, {pipeline_mode = #tpu.pipeline_mode<synchronous>, transform_indices = @transform_4, window_bounds = array<i64: 15, 128>}, {pipeline_mode = #tpu.pipeline_mode<synchronous>, transform_indices = @transform_5, window_bounds = array<i64: 1, 128>}, {pipeline_mode = #tpu.pipeline_mode<synchronous>, transform_indices = @transform_6, window_bounds = array<i64: 128, 11>}, {pipeline_mode = #tpu.pipeline_mode<synchronous>, transform_indices = @transform_7, window_bounds = array<i64: 1, 11>}, {transform_indices = @transform_8, window_bounds = array<i64: 8, 6>}, {transform_indices = @transform_9, window_bounds = array<i64: 8, 5>}]} {
    %c0 = arith.constant 0 : index
    %c0_0 = arith.constant 0 : index
    %0 = vector.load %arg1[%c0, %c0_0] : memref<8x15xf32, #tpu.memory_space<vmem>>, vector<8x15xf32>
    %c0_1 = arith.constant 0 : index
    %c0_2 = arith.constant 0 : index
    %1 = vector.load %arg5[%c0_1, %c0_2] : memref<15x128xf32, #tpu.memory_space<vmem>>, vector<15x128xf32>
    %cst = arith.constant dense<0.000000e+00> : vector<8x128xf32>
    %2 = tpu.matmul %0, %1, %cst {dimension_numbers = #tpu.dot_dimension_numbers<[1], [0], [0], [1], [0, 0, 1, 1], [], []>} : vector<8x15xf32>, vector<15x128xf32>, vector<8x128xf32> -> vector<8x128xf32>
    %c0_3 = arith.constant 0 : index
    %c0_4 = arith.constant 0 : index
    %3 = vector.load %arg6[%c0_3, %c0_4] : memref<1x128xf32, #tpu.memory_space<vmem>>, vector<1x128xf32>
    %4 = vector.broadcast %3 : vector<1x128xf32> to vector<8x128xf32>
    %5 = arith.addf %2, %4 : vector<8x128xf32>
    %cst_5 = arith.constant 0.000000e+00 : f32
    %6 = vector.broadcast %cst_5 : f32 to vector<8x128xf32>
    %7 = arith.maximumf %5, %6 : vector<8x128xf32>
    %c0_6 = arith.constant 0 : index
    %c0_7 = arith.constant 0 : index
    %8 = vector.load %arg7[%c0_6, %c0_7] : memref<128x11xf32, #tpu.memory_space<vmem>>, vector<128x11xf32>
    %cst_8 = arith.constant dense<0.000000e+00> : vector<8x11xf32>
    %9 = tpu.matmul %7, %8, %cst_8 {dimension_numbers = #tpu.dot_dimension_numbers<[1], [0], [0], [1], [0, 0, 1, 1], [], []>} : vector<8x128xf32>, vector<128x11xf32>, vector<8x11xf32> -> vector<8x11xf32>
    %c0_9 = arith.constant 0 : index
    %c0_10 = arith.constant 0 : index
    %10 = vector.load %arg8[%c0_9, %c0_10] : memref<1x11xf32, #tpu.memory_space<vmem>>, vector<1x11xf32>
    %11 = vector.broadcast %10 : vector<1x11xf32> to vector<8x11xf32>
    %12 = arith.addf %9, %11 : vector<8x11xf32>
    %c0_11 = arith.constant 0 : index
    %c0_12 = arith.constant 0 : index
    %13 = vector.load %arg2[%c0_11, %c0_12] : memref<8x11xf32, #tpu.memory_space<vmem>>, vector<8x11xf32>
    %14 = math.floor %13 : vector<8x11xf32>
    %15 = math.ceil %13 : vector<8x11xf32>
    %cst_13 = arith.constant 0.000000e+00 : f32
    %16 = vector.broadcast %cst_13 : f32 to vector<8x11xf32>
    %17 = arith.cmpf oge, %12, %16 : vector<8x11xf32>
    %18 = arith.extui %17 : vector<8x11xi1> to vector<8x11xi32>
    %19 = arith.sitofp %18 : vector<8x11xi32> to vector<8x11xf32>
    %20 = arith.subf %13, %14 : vector<8x11xf32>
    %cst_14 = arith.constant 1.000000e-03 : f32
    %21 = vector.broadcast %cst_14 : f32 to vector<8x11xf32>
    %22 = arith.cmpf olt, %20, %21 : vector<8x11xf32>
    %cst_15 = arith.constant 0.000000e+00 : f32
    %23 = vector.broadcast %cst_15 : f32 to vector<8x11xf32>
    %24 = arith.select %22, %23, %19 : vector<8x11xi1>, vector<8x11xf32>
    %25 = arith.subf %15, %13 : vector<8x11xf32>
    %cst_16 = arith.constant 1.000000e-03 : f32
    %26 = vector.broadcast %cst_16 : f32 to vector<8x11xf32>
    %27 = arith.cmpf olt, %25, %26 : vector<8x11xf32>
    %cst_17 = arith.constant 1.000000e+00 : f32
    %28 = vector.broadcast %cst_17 : f32 to vector<8x11xf32>
    %29 = arith.select %27, %28, %24 : vector<8x11xi1>, vector<8x11xf32>
    %30 = arith.addf %14, %29 : vector<8x11xf32>
    %c0_18 = arith.constant 0 : index
    %c0_19 = arith.constant 0 : index
    %31 = vector.load %arg3[%c0_18, %c0_19] : memref<1x11xf32, #tpu.memory_space<vmem>>, vector<1x11xf32>
    %cst_20 = arith.constant 0.000000e+00 : f32
    %32 = vector.broadcast %cst_20 : f32 to vector<1x11xf32>
    %33 = arith.cmpf one, %31, %32 : vector<1x11xf32>
    %c0_21 = arith.constant 0 : index
    %c0_22 = arith.constant 0 : index
    %34 = vector.load %arg4[%c0_21, %c0_22] : memref<1x11xf32, #tpu.memory_space<vmem>>, vector<1x11xf32>
    %cst_23 = arith.constant 0.000000e+00 : f32
    %35 = vector.broadcast %cst_23 : f32 to vector<1x11xf32>
    %36 = arith.cmpf one, %34, %35 : vector<1x11xf32>
    %37 = vector.shape_cast %33 : vector<1x11xi1> to vector<1x11xi1>
    %38 = vector.broadcast %37 : vector<1x11xi1> to vector<8x11xi1>
    %39 = arith.select %38, %30, %13 : vector<8x11xi1>, vector<8x11xf32>
    %40 = vector.shape_cast %36 : vector<1x11xi1> to vector<1x11xi1>
    %41 = vector.broadcast %40 : vector<1x11xi1> to vector<8x11xi1>
    %42 = arith.select %41, %19, %39 : vector<8x11xi1>, vector<8x11xf32>
    %43 = vector.extract_strided_slice %42 {offsets = [0, 0], sizes = [8, 6], strides = [1, 1]} : vector<8x11xf32> to vector<8x6xf32>
    %c0_24 = arith.constant 0 : index
    %c0_25 = arith.constant 0 : index
    %44 = vector.load %arg9[%c0_24, %c0_25] : memref<8x6xf32, #tpu.memory_space<vmem>>, vector<8x6xf32>
    tpu.vector_store %arg9[%c0_24, %c0_25], %43 {strides = array<i32>} : memref<8x6xf32, #tpu.memory_space<vmem>>, vector<8x6xf32>,
    %45 = vector.extract_strided_slice %42 {offsets = [0, 6], sizes = [8, 5], strides = [1, 1]} : vector<8x11xf32> to vector<8x5xf32>
    %c0_26 = arith.constant 0 : index
    %c0_27 = arith.constant 0 : index
    %46 = vector.load %arg10[%c0_26, %c0_27] : memref<8x5xf32, #tpu.memory_space<vmem>>, vector<8x5xf32>
    tpu.vector_store %arg10[%c0_26, %c0_27], %45 {strides = array<i32>} : memref<8x5xf32, #tpu.memory_space<vmem>>, vector<8x5xf32>,
    return
  }
  func.func @transform_0(%arg0: i32) -> (i32, i32) {
    %c0_i32 = arith.constant 0 : i32
    %c0_i32_0 = arith.constant 0 : i32
    return %arg0, %c0_i32 : i32, i32
  }
  func.func @transform_1(%arg0: i32) -> (i32, i32) {
    %c0_i32 = arith.constant 0 : i32
    %c0_i32_0 = arith.constant 0 : i32
    return %arg0, %c0_i32 : i32, i32
  }
  func.func @transform_2(%arg0: i32) -> (i32, i32) {
    %c0_i32 = arith.constant 0 : i32
    %c0_i32_0 = arith.constant 0 : i32
    %c0_i32_1 = arith.constant 0 : i32
    return %c0_i32, %c0_i32_0 : i32, i32
  }
  func.func @transform_3(%arg0: i32) -> (i32, i32) {
    %c0_i32 = arith.constant 0 : i32
    %c0_i32_0 = arith.constant 0 : i32
    %c0_i32_1 = arith.constant 0 : i32
    return %c0_i32, %c0_i32_0 : i32, i32
  }
  func.func @transform_4(%arg0: i32) -> (i32, i32) {
    %c0_i32 = arith.constant 0 : i32
    %c0_i32_0 = arith.constant 0 : i32
    %c0_i32_1 = arith.constant 0 : i32
    return %c0_i32, %c0_i32_0 : i32, i32
  }
  func.func @transform_5(%arg0: i32) -> (i32, i32) {
    %c0_i32 = arith.constant 0 : i32
    %c0_i32_0 = arith.constant 0 : i32
    %c0_i32_1 = arith.constant 0 : i32
    return %c0_i32, %c0_i32_0 : i32, i32
  }
  func.func @transform_6(%arg0: i32) -> (i32, i32) {
    %c0_i32 = arith.constant 0 : i32
    %c0_i32_0 = arith.constant 0 : i32
    %c0_i32_1 = arith.constant 0 : i32
    return %c0_i32, %c0_i32_0 : i32, i32
  }
  func.func @transform_7(%arg0: i32) -> (i32, i32) {
    %c0_i32 = arith.constant 0 : i32
    %c0_i32_0 = arith.constant 0 : i32
    %c0_i32_1 = arith.constant 0 : i32
    return %c0_i32, %c0_i32_0 : i32, i32
  }
  func.func @transform_8(%arg0: i32) -> (i32, i32) {
    %c0_i32 = arith.constant 0 : i32
    %c0_i32_0 = arith.constant 0 : i32
    return %arg0, %c0_i32 : i32, i32
  }
  func.func @transform_9(%arg0: i32) -> (i32, i32) {
    %c0_i32 = arith.constant 0 : i32
    %c0_i32_0 = arith.constant 0 : i32
    return %arg0, %c0_i32 : i32, i32
  }
}

</mosaic_0001>

<llo_original>
// kernel: tpu_custom_call.1
$region0: #{tpu_custom_call.1}
  #allocation0 [shape = 'u32[]', space=smem, size = 0x4, offset = 0x4, fixed_abs, tag = 'smem constant byte address 0x4 - core index']
  #allocation1 [shape = 'u32[72,128]{1,0:T(1,128)}', space=vmem, size = 0x9000, scoped, tag = 'internal scratch']
  %s0 = inlined_call_operand.vmem [shape: f32[8,15], index: 0, kind: input, shape index: {}]
  %s1 = inlined_call_operand.vmem [shape: f32[8,11], index: 1, kind: input, shape index: {}]
  %s2 = inlined_call_operand.vmem [shape: f32[1,11], index: 2, kind: input, shape index: {}]
  %s3 = inlined_call_operand.vmem [shape: f32[1,11], index: 3, kind: input, shape index: {}]
  %s4 = inlined_call_operand.vmem [shape: f32[15,128], index: 4, kind: input, shape index: {}]
  %s5 = inlined_call_operand.vmem [shape: f32[1,128], index: 5, kind: input, shape index: {}]
  %s6 = inlined_call_operand.vmem [shape: f32[128,11], index: 6, kind: input, shape index: {}]
  %s7 = inlined_call_operand.vmem [shape: f32[1,11], index: 7, kind: input, shape index: {}]
  %s8 = inlined_call_operand.hbm [shape: f32[8,6], index: 8, kind: output, shape index: {0}]
  %s9 = inlined_call_operand.hbm [shape: f32[8,5], index: 9, kind: output, shape index: {1}]
  %10 = xla_tuple %s8, %s9
  %s11 = sld [smem:[#allocation0]]
  $region50: #{tpu_custom_call.1} parent=0
    _
  %s13 = ssub.s32 1, %s11
  %s14 = scalar_select 0, %s13, %s11
  $region1: #{tpu_custom_call.1} parent=0
    #allocation2 [shape = 'u8[4096]{0}', space=vmem, size = 0x1000, scoped, tag = 'output window, operand 0, single buffered']
    #allocation3 [shape = 's32[1]{0}', space=sflag, size = 0x4, scoped, tag = 'scoped memory for tpu_custom_call.1']
    #allocation4 [shape = 'u8[4096]{0}', space=vmem, size = 0x1000, scoped, tag = 'output window, operand 1, single buffered']
    #allocation5 [shape = 's32[1]{0}', space=sflag, size = 0x4, scoped, tag = 'scoped memory for tpu_custom_call.1']
    %15 = vsyncpa [#allocation3], 0
    %16 = vsyncpa [#allocation5], 0
    // Predicated region
    $region2: #{tpu_custom_call.1} parent=1 // pred_check
      _
    $region3: #{tpu_custom_call.1} parent=1 // pred_check_branch
      %18 = sbr.rel (0) target = $region5
    $region4: #{tpu_custom_call.1} parent=1 // pred_region
      _
    $region5: #{tpu_custom_call.1} parent=1 // pred_fallthru
      _
    // Predicated region
    $region6: #{tpu_custom_call.1} parent=1 // pred_check
      _
    $region7: #{tpu_custom_call.1} parent=1 // pred_check_branch
      %20 = sbr.rel (0) target = $region9
    $region8: #{tpu_custom_call.1} parent=1 // pred_region
      _
    $region9: #{tpu_custom_call.1} parent=1 // pred_fallthru
      _
    // Predicated region
    $region10: #{tpu_custom_call.1} parent=1 // pred_check
      _
    $region11: #{tpu_custom_call.1} parent=1 // pred_check_branch
      %22 = sbr.rel (0) target = $region13
    $region12: #{tpu_custom_call.1} parent=1 // pred_region
      _
    $region13: #{tpu_custom_call.1} parent=1 // pred_fallthru
      _
    // Predicated region
    $region14: #{tpu_custom_call.1} parent=1 // pred_check
      _
    $region15: #{tpu_custom_call.1} parent=1 // pred_check_branch
      %24 = sbr.rel (0) target = $region17
    $region16: #{tpu_custom_call.1} parent=1 // pred_region
      _
    $region17: #{tpu_custom_call.1} parent=1 // pred_fallthru
      _
    // Predicated region
    $region18: #{tpu_custom_call.1} parent=1 // pred_check
      _
    $region19: #{tpu_custom_call.1} parent=1 // pred_check_branch
      %26 = sbr.rel (0) target = $region21
    $region20: #{tpu_custom_call.1} parent=1 // pred_region
      _
    $region21: #{tpu_custom_call.1} parent=1 // pred_fallthru
      _
    // Predicated region
    $region22: #{tpu_custom_call.1} parent=1 // pred_check
      _
    $region23: #{tpu_custom_call.1} parent=1 // pred_check_branch
      %28 = sbr.rel (0) target = $region25
    $region24: #{tpu_custom_call.1} parent=1 // pred_region
      _
    $region25: #{tpu_custom_call.1} parent=1 // pred_fallthru
      _
    // Predicated region
    $region26: #{tpu_custom_call.1} parent=1 // pred_check
      _
    $region27: #{tpu_custom_call.1} parent=1 // pred_check_branch
      %30 = sbr.rel (0) target = $region29
    $region28: #{tpu_custom_call.1} parent=1 // pred_region
      _
    $region29: #{tpu_custom_call.1} parent=1 // pred_fallthru
      _
    // Predicated region
    $region30: #{tpu_custom_call.1} parent=1 // pred_check
      _
    $region31: #{tpu_custom_call.1} parent=1 // pred_check_branch
      %32 = sbr.rel (0) target = $region33
    $region32: #{tpu_custom_call.1} parent=1 // pred_region
      _
    $region33: #{tpu_custom_call.1} parent=1 // pred_fallthru
      _
    %v33 = vld [vmem:[%s0] sm:$0xff]
    %v34 = vld [vmem:[%s4] sm:$0xff]
    %v35 = vld [vmem:[%s4 + $0x8] sm:$0x7f]
    %v36 = vld [vmem:[%s5] sm:$0x1]
    %v38 = vperm.slane %v36, 0
    %vm40 = vcmask 121856
    %v42 = vsel %vm40, %v33, 0
    %vm44 = vcmask 1046528
    %v46 = vsel %vm44, %v35, 0
    %48 = vmatpush.msra.mxu0 0.0
    %49 = vmatpush.msra.mxu0 0.0
    %50 = vmatpush.msra.mxu0 0.0
    %51 = vmatpush.msra.mxu0 0.0
    %52 = vmatpush.msra.mxu0 0.0
    %53 = vmatpush.msra.mxu0 0.0
    %54 = vmatpush.msra.mxu0 0.0
    %55 = vmatpush.msra.mxu0 0.0
    %56 = vmatpush.msra.mxu0 0.0
    %57 = vmatpush.msra.mxu0 0.0
    %58 = vmatpush.msra.mxu0 0.0
    %59 = vmatpush.msra.mxu0 0.0
    %60 = vmatpush.msra.mxu0 0.0
    %61 = vmatpush.msra.mxu0 0.0
    %62 = vmatpush.msra.mxu0 %v46
    %63 = vmatpush.msra.mxu0 %v34
    %64 = vmatmul.f32.gmra.mxu0 %v42
    %v65 = vpop.f32.mrf.mxu0
    %v66 = vadd.f32 %v38, %v65
    %67 = vdwg.mxu0
    %v68 = vmax.f32 %v66, 0.0
    %v69 = vld [vmem:[%s6] sm:$0xff]
    %v70 = vld [vmem:[%s6 + $0x8] sm:$0xff]
    %v71 = vld [vmem:[%s6 + $0x10] sm:$0xff]
    %v72 = vld [vmem:[%s6 + $0x18] sm:$0xff]
    %v73 = vld [vmem:[%s6 + $0x20] sm:$0xff]
    %v74 = vld [vmem:[%s6 + $0x28] sm:$0xff]
    %v75 = vld [vmem:[%s6 + $0x30] sm:$0xff]
    %v76 = vld [vmem:[%s6 + $0x38] sm:$0xff]
    %v77 = vld [vmem:[%s6 + $0x40] sm:$0xff]
    %v78 = vld [vmem:[%s6 + $0x48] sm:$0xff]
    %v79 = vld [vmem:[%s6 + $0x50] sm:$0xff]
    %v80 = vld [vmem:[%s6 + $0x58] sm:$0xff]
    %v81 = vld [vmem:[%s6 + $0x60] sm:$0xff]
    %v82 = vld [vmem:[%s6 + $0x68] sm:$0xff]
    %v83 = vld [vmem:[%s6 + $0x70] sm:$0xff]
    %v84 = vld [vmem:[%s6 + $0x78] sm:$0xff]
    %v85 = vld [vmem:[%s7] sm:$0x1]
    %v87 = vperm.slane %v85, 0
    %89 = vmatpush.msra.mxu0 %v84
    %90 = vmatpush.msra.mxu0 %v83
    %91 = vmatpush.msra.mxu0 %v82
    %92 = vmatpush.msra.mxu0 %v81
    %93 = vmatpush.msra.mxu0 %v80
    %94 = vmatpush.msra.mxu0 %v79
    %95 = vmatpush.msra.mxu0 %v78
    %96 = vmatpush.msra.mxu0 %v77
    %97 = vmatpush.msra.mxu0 %v76
    %98 = vmatpush.msra.mxu0 %v75
    %99 = vmatpush.msra.mxu0 %v74
    %100 = vmatpush.msra.mxu0 %v73
    %101 = vmatpush.msra.mxu0 %v72
    %102 = vmatpush.msra.mxu0 %v71
    %103 = vmatpush.msra.mxu0 %v70
    %104 = vmatpush.msra.mxu0 %v69
    %105 = vmatmul.f32.gmra.mxu0 %v68
    %v106 = vpop.f32.mrf.mxu0
    %v107 = vadd.f32 %v87, %v106
    %108 = vdwg.mxu0
    %v109 = vld [vmem:[%s1] sm:$0xff]
    %v110 = vfloor.f32 %v109
    %v111 = vceil.f32 %v109
    %vm112 = vcmp.ge.f32.partialorder %v107, 0.0
    %v113 = vsel %vm112, 1, 0
    %v114 = vcvt.s32.f32 %v113
    %v115 = vsub.f32 %v109, %v110
    %vm116 = vcmp.lt.f32.partialorder %v115, 0.001
    %v117 = vsel %vm116, 0.0, %v114
    %v118 = vsub.f32 %v111, %v109
    %vm119 = vcmp.lt.f32.partialorder %v118, 0.001
    %v120 = vsel %vm119, 1.0, %v117
    %v121 = vadd.f32 %v110, %v120
    %v122 = vld [vmem:[%s2] sm:$0x1]
    %vm123 = vcmp.ne.f32.partialorder %v122, 0.0
    %v124 = vld [vmem:[%s3] sm:$0x1]
    %vm125 = vcmp.ne.f32.partialorder %v124, 0.0
    %v126 = vsel %vm123, 1, 0
    %v127 = vperm.slane %v126, 0
    %vm128 = vcmp.eq.s32.totalorder %v127, 1
    %v129 = vsel %vm128, %v121, %v109
    %v130 = vsel %vm125, 1, 0
    %v131 = vperm.slane %v130, 0
    %vm132 = vcmp.eq.s32.totalorder %v131, 1
    %v133 = vsel %vm132, %v114, %v129
    %vm134 = vcmask 48128
    %135 = vst.msk [vmem:[#allocation2] sm:$0xff] %vm134, %v133
    %137 = vrot.lane.b32.xlu0 %v133, 122
    %v138 = vpop.permute.xlu0 %137
    %vm140 = vcmask 39936
    %141 = vst.msk [vmem:[#allocation4] sm:$0xff] %vm140, %v138
    // Predicated region
    $region34: #{tpu_custom_call.1} parent=1 // pred_check
      _
    $region35: #{tpu_custom_call.1} parent=1 // pred_check_branch
      %143 = sbr.rel (0) target = $region37
    $region36: #{tpu_custom_call.1} parent=1 // pred_region
      %145 = vsyncadd [#allocation3], 0
      %s147 = sshll.u32 [#allocation2], 4
      %s148 = int_to_ptr.vmem [resolvable:$true] %s147
      %s149 = sshll.u32 %s8, 4
      %s150 = int_to_ptr.hbm [resolvable:$true] %s149
      %152 = dma.vmem_to_hbm [thread:$0]  %s148, 128, %s150, [#allocation3]
    $region37: #{tpu_custom_call.1} parent=1 // pred_fallthru
      _
    // Predicated region
    $region38: #{tpu_custom_call.1} parent=1 // pred_check
      _
    $region39: #{tpu_custom_call.1} parent=1 // pred_check_branch
      %154 = sbr.rel (0) target = $region41
    $region40: #{tpu_custom_call.1} parent=1 // pred_region
      %156 = vsyncadd [#allocation5], 0
      %s158 = sshll.u32 [#allocation4], 4
      %s159 = int_to_ptr.vmem [resolvable:$true] %s158
      %s160 = sshll.u32 %s9, 4
      %s161 = int_to_ptr.hbm [resolvable:$true] %s160
      %163 = dma.vmem_to_hbm [thread:$0]  %s159, 128, %s161, [#allocation5]
    $region41: #{tpu_custom_call.1} parent=1 // pred_fallthru
      _
    // Predicated region
    $region42: #{tpu_custom_call.1} parent=1 // pred_check
      _
    $region43: #{tpu_custom_call.1} parent=1 // pred_check_branch
      %165 = sbr.rel (0) target = $region45
    $region44: #{tpu_custom_call.1} parent=1 // pred_region
      %167 = dma.done [#allocation3], 128
    $region45: #{tpu_custom_call.1} parent=1 // pred_fallthru
      _
    // Predicated region
    $region46: #{tpu_custom_call.1} parent=1 // pred_check
      _
    $region47: #{tpu_custom_call.1} parent=1 // pred_check_branch
      %169 = sbr.rel (0) target = $region49
    $region48: #{tpu_custom_call.1} parent=1 // pred_region
      %171 = dma.done [#allocation5], 128
    $region49: #{tpu_custom_call.1} parent=1 // pred_fallthru
      _
    %172 = vsyncpa [#allocation3], 1
    %173 = vsyncpa [#allocation5], 1

</llo_original>
